<compile_context>
chip_gen: v5e
topology: v5e:2x2
jax: 0.10.0
libtpu: 0.0.40
codegen_flags: <defaults>
</compile_context>

<pallas_src>
import jax
import jax.numpy as jnp
from jax.experimental import pallas as pl
from jax.experimental.pallas import tpu as pltpu

BN_EPS = 1e-5


def _round_up(x, m):
    return ((x + m - 1) // m) * m


# ----------------------------------------------------------------------------
# Kernel
# ----------------------------------------------------------------------------
def _linear_block_kernel(alpha_ref, x_ref, w1_ref, wh_ref, w5_ref,
                         vec_ref, b5_ref, o_ref):
    """Entire LinearBlock forward (eval-mode BN) for one batch tile.

    vec_ref rows: 0=b1, 1=s2, 2=t2, 3=b2, 4=s3, 5=t3, 6=b3,
                  7=s4, 8=t4, 9=b4, 10=s5, 11=t5.
    wh_ref: stacked (w2, w3, w4), each (Chid, Chid), bf16.
    lin1's BatchNorm is pre-folded into (w1, b1).
    """
    x = x_ref[...].astype(jnp.float32)

    # lin1: BN folded into the linear weight/bias; bf16 matmul, f32 accumulate.
    x1 = jnp.dot(x.astype(jnp.bfloat16), w1_ref[...],
                 preferred_element_type=jnp.float32) + vec_ref[0:1, :]

    def stage(h, s, t, w, b, a):
        h = h * s + t                         # folded eval-mode BatchNorm1d (f32)
        h = jnp.where(h > 0.0, h, a * h)      # PReLU (single parameter, SMEM scalar)
        return jnp.dot(h.astype(jnp.bfloat16), w,
                       preferred_element_type=jnp.float32) + b

    h2 = stage(x1, vec_ref[1:2, :], vec_ref[2:3, :], wh_ref[0],
               vec_ref[3:4, :], alpha_ref[0])                               # lin2
    x2 = (stage(h2, vec_ref[4:5, :], vec_ref[5:6, :], wh_ref[1],
                vec_ref[6:7, :], alpha_ref[1]) + x1) * 0.5                  # (lin3+x1)/2
    x3 = (stage(x2, vec_ref[7:8, :], vec_ref[8:9, :], wh_ref[2],
                vec_ref[9:10, :], alpha_ref[2]) + x2) * 0.5                 # (lin4+x2)/2
    out = stage(x3, vec_ref[10:11, :], vec_ref[11:12, :], w5_ref[...],
                b5_ref[...], alpha_ref[3])                                  # lin5

    o_ref[...] = out.astype(o_ref.dtype)


# ----------------------------------------------------------------------------
# Wrapper
# ----------------------------------------------------------------------------
def linear_block_forward(x, prep):
    """One pallas_call implementing LinearBlock.forward (eval mode)."""
    B, Cin = x.shape
    Chid = prep["w1"].shape[1]
    Cout = prep["w5"].shape[1]

    # Batch tile: multiple of 8 sublanes; amortizes weight DMA at larger B.
    TB = max(8, min(256, _round_up(B, 8)))
    Bp = _round_up(B, TB)
    if Bp != B:
        x = jnp.pad(x, ((0, Bp - B), (0, 0)))
    nb = Bp // TB

    flops = 2 * Bp * (Cin * Chid + 3 * Chid * Chid + Chid * Cout)
    bytes_accessed = (
        2 * (Cin * Chid + 3 * Chid * Chid + Chid * Cout)   # bf16 weights
        + 4 * (12 * Chid + Cout + 4)                       # f32 vectors + alphas
        + 4 * Bp * (Cin + Cout)                            # activations in/out
    )

    grid_spec = pltpu.PrefetchScalarGridSpec(
        num_scalar_prefetch=0,
        grid=(nb,),
        in_specs=[
            pl.BlockSpec(memory_space=pltpu.MemorySpace.SMEM),       # alphas (4,)
            pl.BlockSpec((TB, Cin), lambda i: (i, 0)),               # x (batch-tiled)
            pl.BlockSpec((Cin, Chid), lambda i: (0, 0)),             # w1 (BN folded)
            pl.BlockSpec((3, Chid, Chid), lambda i: (0, 0, 0)),      # w2,w3,w4 stacked
            pl.BlockSpec((Chid, Cout), lambda i: (0, 0)),            # w5
            pl.BlockSpec((12, Chid), lambda i: (0, 0)),              # stacked b/s/t rows
            pl.BlockSpec((1, Cout), lambda i: (0, 0)),               # b5
        ],
        out_specs=pl.BlockSpec((TB, Cout), lambda i: (i, 0)),
    )

    out = pl.pallas_call(
        _linear_block_kernel,
        out_shape=jax.ShapeDtypeStruct((Bp, Cout), jnp.float32),
        grid_spec=grid_spec,
        compiler_params=pltpu.CompilerParams(
            dimension_semantics=("parallel",)),
        cost_estimate=pl.CostEstimate(flops=flops, transcendentals=0,
                                      bytes_accessed=bytes_accessed),
    )(prep["alphas"], x, prep["w1"], prep["wh"], prep["w5"],
      prep["vec"], prep["b5"])

    return out[:B]


linear_block_forward_jit = jax.jit(linear_block_forward)


# ----------------------------------------------------------------------------
# Parameters: raw (PyTorch-shaped) + one-time prep for the kernel
# ----------------------------------------------------------------------------
def _fold_bn(gamma, beta, mean, var):
    scale = gamma / jnp.sqrt(var + BN_EPS)
    shift = beta - mean * scale
    return scale, shift


def init_params(key, n_feats):
    """Deterministic synthetic parameters matching LinearBlock.__init__ shapes."""
    snd = 6 * n_feats
    dims = [
        (4 * n_feats, snd),  # lin1
        (snd, snd),          # lin2
        (snd, snd),          # lin3
        (snd, snd),          # lin4
        (snd, n_feats),      # lin5
    ]
    params = []
    for i, (din, dout) in enumerate(dims):
        k = jax.random.fold_in(key, i)
        k_w, k_b, k_g, k_be, k_m, k_v = jax.random.split(k, 6)
        p = {
            # nn.Linear stores (out, in); transposed once in prepare_params.
            "W": jax.random.normal(k_w, (dout, din), jnp.float32) * 0.05,
            "b": jax.random.normal(k_b, (dout,), jnp.float32) * 0.05,
            # BatchNorm1d(din) params + running stats (eval-mode semantics).
            "gamma": 1.0 + 0.1 * jax.random.normal(k_g, (din,), jnp.float32),
            "beta": 0.1 * jax.random.normal(k_be, (din,), jnp.float32),
            "mean": 0.1 * jax.random.normal(k_m, (din,), jnp.float32),
            "var": 1.0 + 0.1 * jax.random.uniform(k_v, (din,), jnp.float32),
            # PReLU default single parameter 0.25 (unused for lin1).
            "alpha": jnp.float32(0.25),
        }
        params.append(p)
    return params


def prepare_params(params):
    """One-time prep: fold BN, transpose W, pack vectors/weights, bf16 weights."""
    p1, p2, p3, p4, p5 = params

    # lin1: no PReLU between BN and Linear -> fold BN fully into W/b.
    s1, t1 = _fold_bn(p1["gamma"], p1["beta"], p1["mean"], p1["var"])
    w1_t = p1["W"].T                                     # (in, out) f32
    w1 = (s1[:, None] * w1_t).astype(jnp.bfloat16)
    b1 = (t1 @ w1_t + p1["b"]).astype(jnp.float32)       # (Chid,)

    rows = [b1]
    hidden_ws = []
    alphas = []
    for p in (p2, p3, p4):
        s, t = _fold_bn(p["gamma"], p["beta"], p["mean"], p["var"])
        rows += [s, t, p["b"]]
        hidden_ws.append(p["W"].T)
        alphas.append(jnp.asarray(p["alpha"], jnp.float32))
    s5, t5 = _fold_bn(p5["gamma"], p5["beta"], p5["mean"], p5["var"])
    rows += [s5, t5]
    alphas.append(jnp.asarray(p5["alpha"], jnp.float32))

    return {
        "alphas": jnp.stack(alphas),                                   # (4,)   f32, SMEM
        "w1": w1,                                                      # (Cin, Chid) bf16
        "wh": jnp.stack(hidden_ws).astype(jnp.bfloat16),               # (3, Chid, Chid) bf16
        "w5": p5["W"].T.astype(jnp.bfloat16),                          # (Chid, Cout) bf16
        "vec": jnp.stack(rows).astype(jnp.float32),                    # (12, Chid) f32
        "b5": p5["b"].reshape(1, -1).astype(jnp.float32),              # (1, Cout) f32
    }


# ----------------------------------------------------------------------------
# Pure-JAX references for correctness checks
# ----------------------------------------------------------------------------
def _ref_layer(x, p, use_prelu):
    scale, shift = _fold_bn(p["gamma"], p["beta"], p["mean"], p["var"])
    h = x * scale + shift
    if use_prelu:
        h = jnp.where(h > 0, h, p["alpha"] * h)
    return h @ p["W"].T + p["b"]


def linear_block_reference_f32(x, params):
    """Original module semantics (eval mode), full f32."""
    p1, p2, p3, p4, p5 = params
    x1 = _ref_layer(x, p1, False)
    x2 = (_ref_layer(_ref_layer(x1, p2, True), p3, True) + x1) / 2
    x3 = (_ref_layer(x2, p4, True) + x2) / 2
    return _ref_layer(x3, p5, True)


def linear_block_reference_prep(x, prep):
    """Same math as the kernel (bf16 weights, f32 accumulate), in pure JAX."""
    a = prep["alphas"]
    v = prep["vec"]

    def dot(h, w):
        return jnp.dot(h.astype(jnp.bfloat16), w, preferred_element_type=jnp.float32)

    def stage(h, s, t, w, b, alpha):
        h = h * s + t
        h = jnp.where(h > 0.0, h, alpha * h)
        return dot(h, w) + b

    x1 = dot(x, prep["w1"]) + v[0:1, :]
    h2 = stage(x1, v[1:2], v[2:3], prep["wh"][0], v[3:4], a[0])
    x2 = (stage(h2, v[4:5], v[5:6], prep["wh"][1], v[6:7], a[1]) + x1) * 0.5
    x3 = (stage(x2, v[7:8], v[8:9], prep["wh"][2], v[9:10], a[2]) + x2) * 0.5
    return stage(x3, v[10:11], v[11:12], prep["w5"], prep["b5"], a[3])


if __name__ == "__main__":
    n_feats = 32          # -> in = 128, hidden = 192, out = 32
    batch = 8

    key = jax.random.PRNGKey(0)
    k_x, k_p = jax.random.split(key)
    x = jax.random.normal(k_x, (batch, 4 * n_feats), jnp.float32)

    params = init_params(k_p, n_feats)
    prep = prepare_params(params)          # one-time parameter prep

    out = linear_block_forward_jit(x, prep)
    out = jax.block_until_ready(out)
    assert out.shape == (batch, n_feats), out.shape

    # Kernel vs. identical-math pure-JAX reference (bf16 weights, f32 acc).
    ref_prep = linear_block_reference_prep(x, prep)
    assert jnp.allclose(out, ref_prep, atol=2e-3, rtol=2e-3), \
        float(jnp.max(jnp.abs(out - ref_prep)))

    # Kernel vs. original full-f32 module semantics (loose: bf16 weights).
    ref_f32 = linear_block_reference_f32(x, params)
    assert jnp.allclose(out, ref_f32, atol=5e-2, rtol=5e-2), \
        float(jnp.max(jnp.abs(out - ref_f32)))

    print("KERNEL_OK")
</pallas_src>

<mosaic_0001>
module attributes {stable_mosaic.version = 11 : i64} {
  func.func @_linear_block_kernel(%arg0: i32, %arg1: memref<4xf32, #tpu.memory_space<smem>>, %arg2: memref<8x128xf32, #tpu.memory_space<vmem>>, %arg3: memref<128x192xbf16, #tpu.memory_space<vmem>>, %arg4: memref<3x192x192xbf16, #tpu.memory_space<vmem>>, %arg5: memref<192x32xbf16, #tpu.memory_space<vmem>>, %arg6: memref<12x192xf32, #tpu.memory_space<vmem>>, %arg7: memref<1x32xf32, #tpu.memory_space<vmem>>, %arg8: memref<8x32xf32, #tpu.memory_space<vmem>>) attributes {dimension_semantics = [#tpu.dimension_semantics<parallel>], iteration_bounds = array<i64: 1>, scalar_prefetch = 0 : i64, scratch_operands = 0 : i64, tpu.core_type = #tpu.core_type<tc>, window_params = [{transform_indices = @transform_0, window_bounds = array<i64: 4>}, {transform_indices = @transform_1, window_bounds = array<i64: 8, 128>}, {pipeline_mode = #tpu.pipeline_mode<synchronous>, transform_indices = @transform_2, window_bounds = array<i64: 128, 192>}, {pipeline_mode = #tpu.pipeline_mode<synchronous>, transform_indices = @transform_3, window_bounds = array<i64: 3, 192, 192>}, {pipeline_mode = #tpu.pipeline_mode<synchronous>, transform_indices = @transform_4, window_bounds = array<i64: 192, 32>}, {pipeline_mode = #tpu.pipeline_mode<synchronous>, transform_indices = @transform_5, window_bounds = array<i64: 12, 192>}, {pipeline_mode = #tpu.pipeline_mode<synchronous>, transform_indices = @transform_6, window_bounds = array<i64: 1, 32>}, {transform_indices = @transform_7, window_bounds = array<i64: 8, 32>}]} {
    %c0 = arith.constant 0 : index
    %c0_0 = arith.constant 0 : index
    %0 = vector.load %arg2[%c0, %c0_0] : memref<8x128xf32, #tpu.memory_space<vmem>>, vector<8x128xf32>
    %1 = arith.truncf %0 : vector<8x128xf32> to vector<8x128xbf16>
    %c0_1 = arith.constant 0 : index
    %c0_2 = arith.constant 0 : index
    %2 = vector.load %arg3[%c0_1, %c0_2] : memref<128x192xbf16, #tpu.memory_space<vmem>>, vector<128x192xbf16>
    %cst = arith.constant dense<0.000000e+00> : vector<8x192xf32>
    %3 = tpu.matmul %1, %2, %cst {dimension_numbers = #tpu.dot_dimension_numbers<[1], [0], [0], [1], [0, 0, 1, 1], [], []>} : vector<8x128xbf16>, vector<128x192xbf16>, vector<8x192xf32> -> vector<8x192xf32>
    %c0_3 = arith.constant 0 : index
    %c0_4 = arith.constant 0 : index
    %4 = vector.load %arg6[%c0_3, %c0_4] : memref<12x192xf32, #tpu.memory_space<vmem>>, vector<1x192xf32>
    %5 = vector.broadcast %4 : vector<1x192xf32> to vector<8x192xf32>
    %6 = arith.addf %3, %5 : vector<8x192xf32>
    %c1 = arith.constant 1 : index
    %c0_5 = arith.constant 0 : index
    %7 = vector.load %arg6[%c1, %c0_5] : memref<12x192xf32, #tpu.memory_space<vmem>>, vector<1x192xf32>
    %c2 = arith.constant 2 : index
    %c0_6 = arith.constant 0 : index
    %8 = vector.load %arg6[%c2, %c0_6] : memref<12x192xf32, #tpu.memory_space<vmem>>, vector<1x192xf32>
    %c0_7 = arith.constant 0 : index
    %c0_8 = arith.constant 0 : index
    %c0_9 = arith.constant 0 : index
    %9 = vector.load %arg4[%c0_7, %c0_8, %c0_9] : memref<3x192x192xbf16, #tpu.memory_space<vmem>>, vector<1x192x192xbf16>
    %10 = vector.shape_cast %9 : vector<1x192x192xbf16> to vector<192x192xbf16>
    %c3 = arith.constant 3 : index
    %c0_10 = arith.constant 0 : index
    %11 = vector.load %arg6[%c3, %c0_10] : memref<12x192xf32, #tpu.memory_space<vmem>>, vector<1x192xf32>
    %c0_11 = arith.constant 0 : index
    %12 = memref.load %arg1[%c0_11] : memref<4xf32, #tpu.memory_space<smem>>
    %13 = vector.broadcast %7 : vector<1x192xf32> to vector<8x192xf32>
    %14 = arith.mulf %6, %13 : vector<8x192xf32>
    %15 = vector.broadcast %8 : vector<1x192xf32> to vector<8x192xf32>
    %16 = arith.addf %14, %15 : vector<8x192xf32>
    %cst_12 = arith.constant 0.000000e+00 : f32
    %17 = vector.broadcast %cst_12 : f32 to vector<8x192xf32>
    %18 = arith.cmpf ogt, %16, %17 : vector<8x192xf32>
    %19 = vector.broadcast %12 : f32 to vector<8x192xf32>
    %20 = arith.mulf %19, %16 : vector<8x192xf32>
    %21 = arith.select %18, %16, %20 : vector<8x192xi1>, vector<8x192xf32>
    %22 = arith.truncf %21 : vector<8x192xf32> to vector<8x192xbf16>
    %cst_13 = arith.constant dense<0.000000e+00> : vector<8x192xf32>
    %23 = tpu.matmul %22, %10, %cst_13 {dimension_numbers = #tpu.dot_dimension_numbers<[1], [0], [0], [1], [0, 0, 1, 1], [], []>} : vector<8x192xbf16>, vector<192x192xbf16>, vector<8x192xf32> -> vector<8x192xf32>
    %24 = vector.broadcast %11 : vector<1x192xf32> to vector<8x192xf32>
    %25 = arith.addf %23, %24 : vector<8x192xf32>
    %c4 = arith.constant 4 : index
    %c0_14 = arith.constant 0 : index
    %26 = vector.load %arg6[%c4, %c0_14] : memref<12x192xf32, #tpu.memory_space<vmem>>, vector<1x192xf32>
    %c5 = arith.constant 5 : index
    %c0_15 = arith.constant 0 : index
    %27 = vector.load %arg6[%c5, %c0_15] : memref<12x192xf32, #tpu.memory_space<vmem>>, vector<1x192xf32>
    %c1_16 = arith.constant 1 : index
    %c0_17 = arith.constant 0 : index
    %c0_18 = arith.constant 0 : index
    %28 = vector.load %arg4[%c1_16, %c0_17, %c0_18] : memref<3x192x192xbf16, #tpu.memory_space<vmem>>, vector<1x192x192xbf16>
    %29 = vector.shape_cast %28 : vector<1x192x192xbf16> to vector<192x192xbf16>
    %c6 = arith.constant 6 : index
    %c0_19 = arith.constant 0 : index
    %30 = vector.load %arg6[%c6, %c0_19] : memref<12x192xf32, #tpu.memory_space<vmem>>, vector<1x192xf32>
    %c1_20 = arith.constant 1 : index
    %31 = memref.load %arg1[%c1_20] : memref<4xf32, #tpu.memory_space<smem>>
    %32 = vector.broadcast %26 : vector<1x192xf32> to vector<8x192xf32>
    %33 = arith.mulf %25, %32 : vector<8x192xf32>
    %34 = vector.broadcast %27 : vector<1x192xf32> to vector<8x192xf32>
    %35 = arith.addf %33, %34 : vector<8x192xf32>
    %cst_21 = arith.constant 0.000000e+00 : f32
    %36 = vector.broadcast %cst_21 : f32 to vector<8x192xf32>
    %37 = arith.cmpf ogt, %35, %36 : vector<8x192xf32>
    %38 = vector.broadcast %31 : f32 to vector<8x192xf32>
    %39 = arith.mulf %38, %35 : vector<8x192xf32>
    %40 = arith.select %37, %35, %39 : vector<8x192xi1>, vector<8x192xf32>
    %41 = arith.truncf %40 : vector<8x192xf32> to vector<8x192xbf16>
    %cst_22 = arith.constant dense<0.000000e+00> : vector<8x192xf32>
    %42 = tpu.matmul %41, %29, %cst_22 {dimension_numbers = #tpu.dot_dimension_numbers<[1], [0], [0], [1], [0, 0, 1, 1], [], []>} : vector<8x192xbf16>, vector<192x192xbf16>, vector<8x192xf32> -> vector<8x192xf32>
    %43 = vector.broadcast %30 : vector<1x192xf32> to vector<8x192xf32>
    %44 = arith.addf %42, %43 : vector<8x192xf32>
    %45 = arith.addf %44, %6 : vector<8x192xf32>
    %cst_23 = arith.constant 5.000000e-01 : f32
    %46 = vector.broadcast %cst_23 : f32 to vector<8x192xf32>
    %47 = arith.mulf %45, %46 : vector<8x192xf32>
    %c7 = arith.constant 7 : index
    %c0_24 = arith.constant 0 : index
    %48 = vector.load %arg6[%c7, %c0_24] : memref<12x192xf32, #tpu.memory_space<vmem>>, vector<1x192xf32>
    %c8 = arith.constant 8 : index
    %c0_25 = arith.constant 0 : index
    %49 = vector.load %arg6[%c8, %c0_25] : memref<12x192xf32, #tpu.memory_space<vmem>>, vector<1x192xf32>
    %c2_26 = arith.constant 2 : index
    %c0_27 = arith.constant 0 : index
    %c0_28 = arith.constant 0 : index
    %50 = vector.load %arg4[%c2_26, %c0_27, %c0_28] : memref<3x192x192xbf16, #tpu.memory_space<vmem>>, vector<1x192x192xbf16>
    %51 = vector.shape_cast %50 : vector<1x192x192xbf16> to vector<192x192xbf16>
    %c9 = arith.constant 9 : index
    %c0_29 = arith.constant 0 : index
    %52 = vector.load %arg6[%c9, %c0_29] : memref<12x192xf32, #tpu.memory_space<vmem>>, vector<1x192xf32>
    %c2_30 = arith.constant 2 : index
    %53 = memref.load %arg1[%c2_30] : memref<4xf32, #tpu.memory_space<smem>>
    %54 = vector.broadcast %48 : vector<1x192xf32> to vector<8x192xf32>
    %55 = arith.mulf %47, %54 : vector<8x192xf32>
    %56 = vector.broadcast %49 : vector<1x192xf32> to vector<8x192xf32>
    %57 = arith.addf %55, %56 : vector<8x192xf32>
    %cst_31 = arith.constant 0.000000e+00 : f32
    %58 = vector.broadcast %cst_31 : f32 to vector<8x192xf32>
    %59 = arith.cmpf ogt, %57, %58 : vector<8x192xf32>
    %60 = vector.broadcast %53 : f32 to vector<8x192xf32>
    %61 = arith.mulf %60, %57 : vector<8x192xf32>
    %62 = arith.select %59, %57, %61 : vector<8x192xi1>, vector<8x192xf32>
    %63 = arith.truncf %62 : vector<8x192xf32> to vector<8x192xbf16>
    %cst_32 = arith.constant dense<0.000000e+00> : vector<8x192xf32>
    %64 = tpu.matmul %63, %51, %cst_32 {dimension_numbers = #tpu.dot_dimension_numbers<[1], [0], [0], [1], [0, 0, 1, 1], [], []>} : vector<8x192xbf16>, vector<192x192xbf16>, vector<8x192xf32> -> vector<8x192xf32>
    %65 = vector.broadcast %52 : vector<1x192xf32> to vector<8x192xf32>
    %66 = arith.addf %64, %65 : vector<8x192xf32>
    %67 = arith.addf %66, %47 : vector<8x192xf32>
    %cst_33 = arith.constant 5.000000e-01 : f32
    %68 = vector.broadcast %cst_33 : f32 to vector<8x192xf32>
    %69 = arith.mulf %67, %68 : vector<8x192xf32>
    %c10 = arith.constant 10 : index
    %c0_34 = arith.constant 0 : index
    %70 = vector.load %arg6[%c10, %c0_34] : memref<12x192xf32, #tpu.memory_space<vmem>>, vector<1x192xf32>
    %c11 = arith.constant 11 : index
    %c0_35 = arith.constant 0 : index
    %71 = vector.load %arg6[%c11, %c0_35] : memref<12x192xf32, #tpu.memory_space<vmem>>, vector<1x192xf32>
    %c0_36 = arith.constant 0 : index
    %c0_37 = arith.constant 0 : index
    %72 = vector.load %arg5[%c0_36, %c0_37] : memref<192x32xbf16, #tpu.memory_space<vmem>>, vector<192x32xbf16>
    %c0_38 = arith.constant 0 : index
    %c0_39 = arith.constant 0 : index
    %73 = vector.load %arg7[%c0_38, %c0_39] : memref<1x32xf32, #tpu.memory_space<vmem>>, vector<1x32xf32>
    %c3_40 = arith.constant 3 : index
    %74 = memref.load %arg1[%c3_40] : memref<4xf32, #tpu.memory_space<smem>>
    %75 = vector.broadcast %70 : vector<1x192xf32> to vector<8x192xf32>
    %76 = arith.mulf %69, %75 : vector<8x192xf32>
    %77 = vector.broadcast %71 : vector<1x192xf32> to vector<8x192xf32>
    %78 = arith.addf %76, %77 : vector<8x192xf32>
    %cst_41 = arith.constant 0.000000e+00 : f32
    %79 = vector.broadcast %cst_41 : f32 to vector<8x192xf32>
    %80 = arith.cmpf ogt, %78, %79 : vector<8x192xf32>
    %81 = vector.broadcast %74 : f32 to vector<8x192xf32>
    %82 = arith.mulf %81, %78 : vector<8x192xf32>
    %83 = arith.select %80, %78, %82 : vector<8x192xi1>, vector<8x192xf32>
    %84 = arith.truncf %83 : vector<8x192xf32> to vector<8x192xbf16>
    %cst_42 = arith.constant dense<0.000000e+00> : vector<8x32xf32>
    %85 = tpu.matmul %84, %72, %cst_42 {dimension_numbers = #tpu.dot_dimension_numbers<[1], [0], [0], [1], [0, 0, 1, 1], [], []>} : vector<8x192xbf16>, vector<192x32xbf16>, vector<8x32xf32> -> vector<8x32xf32>
    %86 = vector.broadcast %73 : vector<1x32xf32> to vector<8x32xf32>
    %87 = arith.addf %85, %86 : vector<8x32xf32>
    %c0_43 = arith.constant 0 : index
    %c0_44 = arith.constant 0 : index
    %88 = vector.load %arg8[%c0_43, %c0_44] : memref<8x32xf32, #tpu.memory_space<vmem>>, vector<8x32xf32>
    tpu.vector_store %arg8[%c0_43, %c0_44], %87 {strides = array<i32>} : memref<8x32xf32, #tpu.memory_space<vmem>>, vector<8x32xf32>,
    return
  }
  func.func @transform_0(%arg0: i32) -> i32 {
    %c0_i32 = arith.constant 0 : i32
    %c0_i32_0 = arith.constant 0 : i32
    return %c0_i32 : i32
  }
  func.func @transform_1(%arg0: i32) -> (i32, i32) {
    %c0_i32 = arith.constant 0 : i32
    %c0_i32_0 = arith.constant 0 : i32
    return %arg0, %c0_i32 : i32, i32
  }
  func.func @transform_2(%arg0: i32) -> (i32, i32) {
    %c0_i32 = arith.constant 0 : i32
    %c0_i32_0 = arith.constant 0 : i32
    %c0_i32_1 = arith.constant 0 : i32
    return %c0_i32, %c0_i32_0 : i32, i32
  }
  func.func @transform_3(%arg0: i32) -> (i32, i32, i32) {
    %c0_i32 = arith.constant 0 : i32
    %c0_i32_0 = arith.constant 0 : i32
    %c0_i32_1 = arith.constant 0 : i32
    %c0_i32_2 = arith.constant 0 : i32
    return %c0_i32, %c0_i32_0, %c0_i32_1 : i32, i32, i32
  }
  func.func @transform_4(%arg0: i32) -> (i32, i32) {
    %c0_i32 = arith.constant 0 : i32
    %c0_i32_0 = arith.constant 0 : i32
    %c0_i32_1 = arith.constant 0 : i32
    return %c0_i32, %c0_i32_0 : i32, i32
  }
  func.func @transform_5(%arg0: i32) -> (i32, i32) {
    %c0_i32 = arith.constant 0 : i32
    %c0_i32_0 = arith.constant 0 : i32
    %c0_i32_1 = arith.constant 0 : i32
    return %c0_i32, %c0_i32_0 : i32, i32
  }
  func.func @transform_6(%arg0: i32) -> (i32, i32) {
    %c0_i32 = arith.constant 0 : i32
    %c0_i32_0 = arith.constant 0 : i32
    %c0_i32_1 = arith.constant 0 : i32
    return %c0_i32, %c0_i32_0 : i32, i32
  }
  func.func @transform_7(%arg0: i32) -> (i32, i32) {
    %c0_i32 = arith.constant 0 : i32
    %c0_i32_0 = arith.constant 0 : i32
    return %arg0, %c0_i32 : i32, i32
  }
}

</mosaic_0001>

<llo_original>
// kernel: linear_block_forward.1
$region0: #{linear_block_forward.1}
  #allocation0 [shape = 'u32[]', space=smem, size = 0x4, offset = 0x4, fixed_abs, tag = 'smem constant byte address 0x4 - core index']
  #allocation1 [shape = 'u32[72,128]{1,0:T(1,128)}', space=vmem, size = 0x9000, scoped, tag = 'internal scratch']
  %s0 = inlined_call_operand.vmem [shape: f32[4], index: 0, kind: input, shape index: {}]
  %s1 = inlined_call_operand.vmem [shape: f32[8,128], index: 1, kind: input, shape index: {}]
  %s2 = inlined_call_operand.vmem [shape: bf16[128,192], index: 2, kind: input, shape index: {}]
  %s3 = inlined_call_operand.hbm [shape: bf16[3,192,192], index: 3, kind: input, shape index: {}]
  %s4 = inlined_call_operand.vmem [shape: bf16[192,32], index: 4, kind: input, shape index: {}]
  %s5 = inlined_call_operand.vmem [shape: f32[12,192], index: 5, kind: input, shape index: {}]
  %s6 = inlined_call_operand.vmem [shape: f32[1,32], index: 6, kind: input, shape index: {}]
  %s7 = inlined_call_operand.hbm [shape: f32[8,32], index: 7, kind: output, shape index: {}]
  %s8 = sld [smem:[#allocation0]]
  $region46: #{linear_block_forward.1} parent=0
    _
  %s10 = ssub.s32 1, %s8
  %s11 = scalar_select 0, %s10, %s8
  $region1: #{linear_block_forward.1} parent=0
    #allocation2 [shape = 'u8[512]{0}', space=smem, size = 0x200, scoped, tag = 'input window, operand 0, single buffered']
    #allocation3 [shape = 's32[1]{0}', space=sflag, size = 0x4, scoped, tag = 'scoped memory for linear_block_forward.1']
    #allocation4 [shape = 's32[1]{0}', space=sflag, size = 0x4, scoped, tag = 'scoped memory for linear_block_forward.1']
    #allocation5 [shape = 's32[1]{0}', space=sflag, size = 0x4, scoped, tag = 'scoped memory for linear_block_forward.1']
    #allocation6 [shape = 'u8[294912]{0}', space=vmem, size = 0x48000, scoped, tag = 'input window, operand 3, single buffered']
    #allocation7 [shape = 'u8[4096]{0}', space=vmem, size = 0x1000, scoped, tag = 'output window, operand 0, single buffered']
    %12 = vsyncpa [#allocation5], 0
    %13 = vsyncpa [#allocation3], 0
    %14 = vsyncpa [#allocation4], 0
    // Predicated region
    $region2: #{linear_block_forward.1} parent=1 // pred_check
      _
    $region3: #{linear_block_forward.1} parent=1 // pred_check_branch
      %16 = sbr.rel (0) target = $region5
    $region4: #{linear_block_forward.1} parent=1 // pred_region
      %18 = vsyncadd [#allocation5], 0
      %s20 = sshll.u32 %s0, 4
      %s21 = int_to_ptr.vmem [resolvable:$true] %s20
      %23 = dma.vmem_to_smem %s21, 16, [#allocation2], [#allocation5]
    $region5: #{linear_block_forward.1} parent=1 // pred_fallthru
      _
    // Predicated region
    $region6: #{linear_block_forward.1} parent=1 // pred_check
      _
    $region7: #{linear_block_forward.1} parent=1 // pred_check_branch
      %25 = sbr.rel (0) target = $region9
    $region8: #{linear_block_forward.1} parent=1 // pred_region
      _
    $region9: #{linear_block_forward.1} parent=1 // pred_fallthru
      _
    // Predicated region
    $region10: #{linear_block_forward.1} parent=1 // pred_check
      _
    $region11: #{linear_block_forward.1} parent=1 // pred_check_branch
      %27 = sbr.rel (0) target = $region13
    $region12: #{linear_block_forward.1} parent=1 // pred_region
      _
    $region13: #{linear_block_forward.1} parent=1 // pred_fallthru
      _
    // Predicated region
    $region14: #{linear_block_forward.1} parent=1 // pred_check
      _
    $region15: #{linear_block_forward.1} parent=1 // pred_check_branch
      %29 = sbr.rel (0) target = $region17
    $region16: #{linear_block_forward.1} parent=1 // pred_region
      %31 = vsyncadd [#allocation3], 0
      %s32 = sshll.u32 %s3, 4
      %s33 = int_to_ptr.hbm [resolvable:$true] %s32
      %s34 = sshll.u32 [#allocation6], 4
      %s35 = int_to_ptr.vmem [resolvable:$true] %s34
      %40 = dma.hbm_to_vmem [thread:$0]  %s33, 9216, %s35, [#allocation3], 128, 128, 8
    $region17: #{linear_block_forward.1} parent=1 // pred_fallthru
      _
    // Predicated region
    $region18: #{linear_block_forward.1} parent=1 // pred_check
      _
    $region19: #{linear_block_forward.1} parent=1 // pred_check_branch
      %42 = sbr.rel (0) target = $region21
    $region20: #{linear_block_forward.1} parent=1 // pred_region
      _
    $region21: #{linear_block_forward.1} parent=1 // pred_fallthru
      _
    // Predicated region
    $region22: #{linear_block_forward.1} parent=1 // pred_check
      _
    $region23: #{linear_block_forward.1} parent=1 // pred_check_branch
      %44 = sbr.rel (0) target = $region25
    $region24: #{linear_block_forward.1} parent=1 // pred_region
      _
    $region25: #{linear_block_forward.1} parent=1 // pred_fallthru
      _
    // Predicated region
    $region26: #{linear_block_forward.1} parent=1 // pred_check
      _
    $region27: #{linear_block_forward.1} parent=1 // pred_check_branch
      %46 = sbr.rel (0) target = $region29
    $region28: #{linear_block_forward.1} parent=1 // pred_region
      _
    $region29: #{linear_block_forward.1} parent=1 // pred_fallthru
      _
    // Predicated region
    $region30: #{linear_block_forward.1} parent=1 // pred_check
      _
    $region31: #{linear_block_forward.1} parent=1 // pred_check_branch
      %48 = sbr.rel (0) target = $region33
    $region32: #{linear_block_forward.1} parent=1 // pred_region
      %50 = dma.done [#allocation5], 16
    $region33: #{linear_block_forward.1} parent=1 // pred_fallthru
      _
    // Predicated region
    $region34: #{linear_block_forward.1} parent=1 // pred_check
      _
    $region35: #{linear_block_forward.1} parent=1 // pred_check_branch
      %52 = sbr.rel (0) target = $region37
    $region36: #{linear_block_forward.1} parent=1 // pred_region
      %54 = dma.done [#allocation3], 9216
    $region37: #{linear_block_forward.1} parent=1 // pred_fallthru
      _
    %55 = sfence
    %v57 = vld [vmem:[%s1] sm:$0xff]
    %v58 = vpack.c.bf16 %v57, %v57
    %v59 = vld [vmem:[%s2] sm:$0xff]
    %v60 = vld [vmem:[%s2 + $0x8] sm:$0xff]
    %v61 = vld [vmem:[%s2 + $0x10] sm:$0xff]
    %v62 = vld [vmem:[%s2 + $0x18] sm:$0xff]
    %v63 = vld [vmem:[%s2 + $0x20] sm:$0xff]
    %v64 = vld [vmem:[%s2 + $0x28] sm:$0xff]
    %v65 = vld [vmem:[%s2 + $0x30] sm:$0xff]
    %v66 = vld [vmem:[%s2 + $0x38] sm:$0xff]
    %v67 = vld [vmem:[%s2 + $0x40] sm:$0xff]
    %v68 = vld [vmem:[%s2 + $0x48] sm:$0xff]
    %v69 = vld [vmem:[%s2 + $0x50] sm:$0xff]
    %v70 = vld [vmem:[%s2 + $0x58] sm:$0xff]
    %v71 = vld [vmem:[%s2 + $0x60] sm:$0xff]
    %v72 = vld [vmem:[%s2 + $0x68] sm:$0xff]
    %v73 = vld [vmem:[%s2 + $0x70] sm:$0xff]
    %v74 = vld [vmem:[%s2 + $0x78] sm:$0xff]
    %v75 = vld [vmem:[%s5] ss:$8 sm:$0x3]
    %v77 = vperm.slane %v75, 0
    %v78 = vperm.slane %v75, 1
    %v97 = vunpack.c.l.b16 %v59
    %v98 = vunpack.c.h.b16 %v59
    %v99 = vunpack.c.l.b16 %v60
    %v100 = vunpack.c.h.b16 %v60
    %v101 = vunpack.c.l.b16 %v61
    %v102 = vunpack.c.h.b16 %v61
    %v103 = vunpack.c.l.b16 %v62
    %v104 = vunpack.c.h.b16 %v62
    %v105 = vunpack.c.l.b16 %v63
    %v106 = vunpack.c.h.b16 %v63
    %v107 = vunpack.c.l.b16 %v64
    %v108 = vunpack.c.h.b16 %v64
    %v109 = vunpack.c.l.b16 %v65
    %v110 = vunpack.c.h.b16 %v65
    %v111 = vunpack.c.l.b16 %v66
    %v112 = vunpack.c.h.b16 %v66
    %v113 = vunpack.c.l.b16 %v67
    %v114 = vunpack.c.h.b16 %v67
    %v115 = vunpack.c.l.b16 %v68
    %v116 = vunpack.c.h.b16 %v68
    %v117 = vunpack.c.l.b16 %v69
    %v118 = vunpack.c.h.b16 %v69
    %v119 = vunpack.c.l.b16 %v70
    %v120 = vunpack.c.h.b16 %v70
    %v121 = vunpack.c.l.b16 %v71
    %v122 = vunpack.c.h.b16 %v71
    %v123 = vunpack.c.l.b16 %v72
    %v124 = vunpack.c.h.b16 %v72
    %v125 = vunpack.c.l.b16 %v73
    %v126 = vunpack.c.h.b16 %v73
    %v127 = vunpack.c.l.b16 %v74
    %v128 = vunpack.c.h.b16 %v74
    %v129 = vpack.c.b16 %v99, %v97
    %v130 = vpack.c.b16 %v100, %v98
    %v131 = vpack.c.b16 %v103, %v101
    %v132 = vpack.c.b16 %v104, %v102
    %v133 = vpack.c.b16 %v107, %v105
    %v134 = vpack.c.b16 %v108, %v106
    %v135 = vpack.c.b16 %v111, %v109
    %v136 = vpack.c.b16 %v112, %v110
    %v137 = vpack.c.b16 %v115, %v113
    %v138 = vpack.c.b16 %v116, %v114
    %v139 = vpack.c.b16 %v119, %v117
    %v140 = vpack.c.b16 %v120, %v118
    %v141 = vpack.c.b16 %v123, %v121
    %v142 = vpack.c.b16 %v124, %v122
    %v143 = vpack.c.b16 %v127, %v125
    %v144 = vpack.c.b16 %v128, %v126
    %161 = vmatpush.bf16.msra.mxu0 %v143
    %162 = vmatpush.bf16.msra.mxu0 %v141
    %163 = vmatpush.bf16.msra.mxu0 %v139
    %164 = vmatpush.bf16.msra.mxu0 %v137
    %165 = vmatpush.bf16.msra.mxu0 %v135
    %166 = vmatpush.bf16.msra.mxu0 %v133
    %167 = vmatpush.bf16.msra.mxu0 %v131
    %168 = vmatpush.bf16.msra.mxu0 %v129
    %169 = vmatmul.bf16.gmra.mxu0 %v58
    %v170 = vpop.f32.mrf.mxu0
    %v171 = vadd.f32 %v77, %v170
    %v172 = vpop.f32.mrf.mxu0
    %173 = vdwg.mxu0
    %174 = vmatpush.bf16.msra.mxu0 %v144
    %175 = vmatpush.bf16.msra.mxu0 %v142
    %176 = vmatpush.bf16.msra.mxu0 %v140
    %177 = vmatpush.bf16.msra.mxu0 %v138
    %178 = vmatpush.bf16.msra.mxu0 %v136
    %179 = vmatpush.bf16.msra.mxu0 %v134
    %180 = vmatpush.bf16.msra.mxu0 %v132
    %181 = vmatpush.bf16.msra.mxu0 %v130
    %182 = vmatmul.bf16.gmra.mxu0 %v58
    %v183 = vpop.f32.mrf.mxu0
    %v184 = vadd.f32 %v78, %v183
    %v185 = vpop.f32.mrf.mxu0
    %186 = vdwg.mxu0
    %s187 = scalar_lea.vmem %s5, 1
    %v188 = vld [vmem:[%s187] ss:$8 sm:$0x3]
    %s189 = scalar_lea.vmem %s5, 2
    %v190 = vld [vmem:[%s189] ss:$8 sm:$0x3]
    %v191 = vld [vmem:[#allocation6] sm:$0xff]
    %v192 = vld [vmem:[#allocation6 + $0x8] sm:$0xff]
    %v193 = vld [vmem:[#allocation6 + $0x10] sm:$0xff]
    %v194 = vld [vmem:[#allocation6 + $0x18] sm:$0xff]
    %v195 = vld [vmem:[#allocation6 + $0x20] sm:$0xff]
    %v196 = vld [vmem:[#allocation6 + $0x28] sm:$0xff]
    %v197 = vld [vmem:[#allocation6 + $0x30] sm:$0xff]
    %v198 = vld [vmem:[#allocation6 + $0x38] sm:$0xff]
    %v199 = vld [vmem:[#allocation6 + $0x40] sm:$0xff]
    %v200 = vld [vmem:[#allocation6 + $0x48] sm:$0xff]
    %v201 = vld [vmem:[#allocation6 + $0x50] sm:$0xff]
    %v202 = vld [vmem:[#allocation6 + $0x58] sm:$0xff]
    %v203 = vld [vmem:[#allocation6 + $0x60] sm:$0xff]
    %v204 = vld [vmem:[#allocation6 + $0x68] sm:$0xff]
    %v205 = vld [vmem:[#allocation6 + $0x70] sm:$0xff]
    %v206 = vld [vmem:[#allocation6 + $0x78] sm:$0xff]
    %v207 = vld [vmem:[#allocation6 + $0x80] sm:$0xff]
    %v208 = vld [vmem:[#allocation6 + $0x88] sm:$0xff]
    %v209 = vld [vmem:[#allocation6 + $0x90] sm:$0xff]
    %v210 = vld [vmem:[#allocation6 + $0x98] sm:$0xff]
    %v211 = vld [vmem:[#allocation6 + $0xa0] sm:$0xff]
    %v212 = vld [vmem:[#allocation6 + $0xa8] sm:$0xff]
    %v213 = vld [vmem:[#allocation6 + $0xb0] sm:$0xff]
    %v214 = vld [vmem:[#allocation6 + $0xb8] sm:$0xff]
    %s215 = scalar_lea.vmem %s5, 3
    %v216 = vld [vmem:[%s215] ss:$8 sm:$0x3]
    %s217 = sld [smem:[#allocation2]]
    %v219 = vperm.slane %v188, 0
    %v220 = vperm.slane %v188, 1
    %v223 = vmul.f32 %v171, %v219
    %v224 = vmul.f32 %v184, %v220
    %v226 = vperm.slane %v190, 0
    %v227 = vperm.slane %v190, 1
    %v230 = vadd.f32 %v223, %v226
    %v231 = vadd.f32 %v224, %v227
    %vm232 = vcmp.gt.f32.partialorder %v230, 0.0
    %vm233 = vcmp.gt.f32.partialorder %v231, 0.0
    %v234 = vstv %s217
    %v235 = vmul.f32 %v234, %v230
    %v236 = vmul.f32 %v234, %v231
    %v237 = vsel %vm232, %v230, %v235
    %v238 = vsel %vm233, %v231, %v236
    %v239 = vpack.c.bf16 %v237, %v237
    %v240 = vpack.c.bf16 %v238, %v238
    %v242 = vperm.slane %v216, 0
    %v243 = vperm.slane %v216, 1
    %v270 = vunpack.c.l.b16 %v191
    %v271 = vunpack.c.h.b16 %v191
    %v272 = vunpack.c.l.b16 %v192
    %v273 = vunpack.c.h.b16 %v192
    %v274 = vunpack.c.l.b16 %v193
    %v275 = vunpack.c.h.b16 %v193
    %v276 = vunpack.c.l.b16 %v194
    %v277 = vunpack.c.h.b16 %v194
    %v278 = vunpack.c.l.b16 %v195
    %v279 = vunpack.c.h.b16 %v195
    %v280 = vunpack.c.l.b16 %v196
    %v281 = vunpack.c.h.b16 %v196
    %v282 = vunpack.c.l.b16 %v197
    %v283 = vunpack.c.h.b16 %v197
    %v284 = vunpack.c.l.b16 %v198
    %v285 = vunpack.c.h.b16 %v198
    %v286 = vunpack.c.l.b16 %v199
    %v287 = vunpack.c.h.b16 %v199
    %v288 = vunpack.c.l.b16 %v200
    %v289 = vunpack.c.h.b16 %v200
    %v290 = vunpack.c.l.b16 %v201
    %v291 = vunpack.c.h.b16 %v201
    %v292 = vunpack.c.l.b16 %v202
    %v293 = vunpack.c.h.b16 %v202
    %v294 = vunpack.c.l.b16 %v203
    %v295 = vunpack.c.h.b16 %v203
    %v296 = vunpack.c.l.b16 %v204
    %v297 = vunpack.c.h.b16 %v204
    %v298 = vunpack.c.l.b16 %v205
    %v299 = vunpack.c.h.b16 %v205
    %v300 = vunpack.c.l.b16 %v206
    %v301 = vunpack.c.h.b16 %v206
    %v302 = vunpack.c.l.b16 %v207
    %v303 = vunpack.c.h.b16 %v207
    %v304 = vunpack.c.l.b16 %v208
    %v305 = vunpack.c.h.b16 %v208
    %v306 = vunpack.c.l.b16 %v209
    %v307 = vunpack.c.h.b16 %v209
    %v308 = vunpack.c.l.b16 %v210
    %v309 = vunpack.c.h.b16 %v210
    %v310 = vunpack.c.l.b16 %v211
    %v311 = vunpack.c.h.b16 %v211
    %v312 = vunpack.c.l.b16 %v212
    %v313 = vunpack.c.h.b16 %v212
    %v314 = vunpack.c.l.b16 %v213
    %v315 = vunpack.c.h.b16 %v213
    %v316 = vunpack.c.l.b16 %v214
    %v317 = vunpack.c.h.b16 %v214
    %v318 = vpack.c.b16 %v272, %v270
    %v319 = vpack.c.b16 %v273, %v271
    %v320 = vpack.c.b16 %v276, %v274
    %v321 = vpack.c.b16 %v277, %v275
    %v322 = vpack.c.b16 %v280, %v278
    %v323 = vpack.c.b16 %v281, %v279
    %v324 = vpack.c.b16 %v284, %v282
    %v325 = vpack.c.b16 %v285, %v283
    %v326 = vpack.c.b16 %v288, %v286
    %v327 = vpack.c.b16 %v289, %v287
    %v328 = vpack.c.b16 %v292, %v290
    %v329 = vpack.c.b16 %v293, %v291
    %v330 = vpack.c.b16 %v296, %v294
    %v331 = vpack.c.b16 %v297, %v295
    %v332 = vpack.c.b16 %v300, %v298
    %v333 = vpack.c.b16 %v301, %v299
    %v334 = vpack.c.b16 %v304, %v302
    %v335 = vpack.c.b16 %v305, %v303
    %v336 = vpack.c.b16 %v308, %v306
    %v337 = vpack.c.b16 %v309, %v307
    %v338 = vpack.c.b16 %v312, %v310
    %v339 = vpack.c.b16 %v313, %v311
    %v340 = vpack.c.b16 %v316, %v314
    %v341 = vpack.c.b16 %v317, %v315
    %vm366 = vcmask 523264
    %v368 = vsel %vm366, %v240, 0
    %370 = vmatpush.bf16.msra.mxu0 %v332
    %371 = vmatpush.bf16.msra.mxu0 %v330
    %372 = vmatpush.bf16.msra.mxu0 %v328
    %373 = vmatpush.bf16.msra.mxu0 %v326
    %374 = vmatpush.bf16.msra.mxu0 %v324
    %375 = vmatpush.bf16.msra.mxu0 %v322
    %376 = vmatpush.bf16.msra.mxu0 %v320
    %377 = vmatpush.bf16.msra.mxu0 %v318
    %378 = vmatmul.bf16.gmra.mxu0 %v239
    %v379 = vpop.f32.mrf.mxu0
    %v380 = vadd.f32 %v242, %v379
    %v381 = vpop.f32.mrf.mxu0
    %382 = vdwg.mxu0
    %383 = vmatpush.bf16.msra.mxu0 0
    %384 = vmatpush.bf16.msra.mxu0 0
    %385 = vmatpush.bf16.msra.mxu0 0
    %386 = vmatpush.bf16.msra.mxu0 0
    %387 = vmatpush.bf16.msra.mxu0 %v340
    %388 = vmatpush.bf16.msra.mxu0 %v338
    %389 = vmatpush.bf16.msra.mxu0 %v336
    %390 = vmatpush.bf16.msra.mxu0 %v334
    %391 = vmatmul.bf16.gmra.mxu0 %v368
    %v392 = vpop.f32.mrf.mxu0
    %v393 = vadd.f32 %v380, %v392
    %v394 = vpop.f32.mrf.mxu0
    %395 = vdwg.mxu0
    %396 = vmatpush.bf16.msra.mxu0 %v333
    %397 = vmatpush.bf16.msra.mxu0 %v331
    %398 = vmatpush.bf16.msra.mxu0 %v329
    %399 = vmatpush.bf16.msra.mxu0 %v327
    %400 = vmatpush.bf16.msra.mxu0 %v325
    %401 = vmatpush.bf16.msra.mxu0 %v323
    %402 = vmatpush.bf16.msra.mxu0 %v321
    %403 = vmatpush.bf16.msra.mxu0 %v319
    %404 = vmatmul.bf16.gmra.mxu0 %v239
    %v405 = vpop.f32.mrf.mxu0
    %v406 = vadd.f32 %v243, %v405
    %v407 = vpop.f32.mrf.mxu0
    %408 = vdwg.mxu0
    %409 = vmatpush.bf16.msra.mxu0 0
    %410 = vmatpush.bf16.msra.mxu0 0
    %411 = vmatpush.bf16.msra.mxu0 0
    %412 = vmatpush.bf16.msra.mxu0 0
    %413 = vmatpush.bf16.msra.mxu0 %v341
    %414 = vmatpush.bf16.msra.mxu0 %v339
    %415 = vmatpush.bf16.msra.mxu0 %v337
    %416 = vmatpush.bf16.msra.mxu0 %v335
    %417 = vmatmul.bf16.gmra.mxu0 %v368
    %v418 = vpop.f32.mrf.mxu0
    %v419 = vadd.f32 %v406, %v418
    %v420 = vpop.f32.mrf.mxu0
    %421 = vdwg.mxu0
    %s422 = scalar_lea.vmem %s5, 4
    %v423 = vld [vmem:[%s422] ss:$8 sm:$0x3]
    %s424 = scalar_lea.vmem %s5, 5
    %v425 = vld [vmem:[%s424] ss:$8 sm:$0x3]
    %s426 = scalar_lea.vmem [#allocation6], 192
    %v427 = vld [vmem:[%s426] sm:$0xff]
    %v428 = vld [vmem:[%s426 + $0x8] sm:$0xff]
    %v429 = vld [vmem:[%s426 + $0x10] sm:$0xff]
    %v430 = vld [vmem:[%s426 + $0x18] sm:$0xff]
    %v431 = vld [vmem:[%s426 + $0x20] sm:$0xff]
    %v432 = vld [vmem:[%s426 + $0x28] sm:$0xff]
    %v433 = vld [vmem:[%s426 + $0x30] sm:$0xff]
    %v434 = vld [vmem:[%s426 + $0x38] sm:$0xff]
    %v435 = vld [vmem:[%s426 + $0x40] sm:$0xff]
    %v436 = vld [vmem:[%s426 + $0x48] sm:$0xff]
    %v437 = vld [vmem:[%s426 + $0x50] sm:$0xff]
    %v438 = vld [vmem:[%s426 + $0x58] sm:$0xff]
    %v439 = vld [vmem:[%s426 + $0x60] sm:$0xff]
    %v440 = vld [vmem:[%s426 + $0x68] sm:$0xff]
    %v441 = vld [vmem:[%s426 + $0x70] sm:$0xff]
    %v442 = vld [vmem:[%s426 + $0x78] sm:$0xff]
    %v443 = vld [vmem:[%s426 + $0x80] sm:$0xff]
    %v444 = vld [vmem:[%s426 + $0x88] sm:$0xff]
    %v445 = vld [vmem:[%s426 + $0x90] sm:$0xff]
    %v446 = vld [vmem:[%s426 + $0x98] sm:$0xff]
    %v447 = vld [vmem:[%s426 + $0xa0] sm:$0xff]
    %v448 = vld [vmem:[%s426 + $0xa8] sm:$0xff]
    %v449 = vld [vmem:[%s426 + $0xb0] sm:$0xff]
    %v450 = vld [vmem:[%s426 + $0xb8] sm:$0xff]
    %s451 = scalar_lea.vmem %s5, 6
    %v452 = vld [vmem:[%s451] ss:$8 sm:$0x3]
    %s453 = sld [smem:[#allocation2 + $0x1]]
    %v455 = vperm.slane %v423, 0
    %v456 = vperm.slane %v423, 1
    %v459 = vmul.f32 %v393, %v455
    %v460 = vmul.f32 %v419, %v456
    %v462 = vperm.slane %v425, 0
    %v463 = vperm.slane %v425, 1
    %v466 = vadd.f32 %v459, %v462
    %v467 = vadd.f32 %v460, %v463
    %vm468 = vcmp.gt.f32.partialorder %v466, 0.0
    %vm469 = vcmp.gt.f32.partialorder %v467, 0.0
    %v470 = vstv %s453
    %v471 = vmul.f32 %v470, %v466
    %v472 = vmul.f32 %v470, %v467
    %v473 = vsel %vm468, %v466, %v471
    %v474 = vsel %vm469, %v467, %v472
    %v475 = vpack.c.bf16 %v473, %v473
    %v476 = vpack.c.bf16 %v474, %v474
    %v478 = vperm.slane %v452, 0
    %v479 = vperm.slane %v452, 1
    %v506 = vunpack.c.l.b16 %v427
    %v507 = vunpack.c.h.b16 %v427
    %v508 = vunpack.c.l.b16 %v428
    %v509 = vunpack.c.h.b16 %v428
    %v510 = vunpack.c.l.b16 %v429
    %v511 = vunpack.c.h.b16 %v429
    %v512 = vunpack.c.l.b16 %v430
    %v513 = vunpack.c.h.b16 %v430
    %v514 = vunpack.c.l.b16 %v431
    %v515 = vunpack.c.h.b16 %v431
    %v516 = vunpack.c.l.b16 %v432
    %v517 = vunpack.c.h.b16 %v432
    %v518 = vunpack.c.l.b16 %v433
    %v519 = vunpack.c.h.b16 %v433
    %v520 = vunpack.c.l.b16 %v434
    %v521 = vunpack.c.h.b16 %v434
    %v522 = vunpack.c.l.b16 %v435
    %v523 = vunpack.c.h.b16 %v435
    %v524 = vunpack.c.l.b16 %v436
    %v525 = vunpack.c.h.b16 %v436
    %v526 = vunpack.c.l.b16 %v437
    %v527 = vunpack.c.h.b16 %v437
    %v528 = vunpack.c.l.b16 %v438
    %v529 = vunpack.c.h.b16 %v438
    %v530 = vunpack.c.l.b16 %v439
    %v531 = vunpack.c.h.b16 %v439
    %v532 = vunpack.c.l.b16 %v440
    %v533 = vunpack.c.h.b16 %v440
    %v534 = vunpack.c.l.b16 %v441
    %v535 = vunpack.c.h.b16 %v441
    %v536 = vunpack.c.l.b16 %v442
    %v537 = vunpack.c.h.b16 %v442
    %v538 = vunpack.c.l.b16 %v443
    %v539 = vunpack.c.h.b16 %v443
    %v540 = vunpack.c.l.b16 %v444
    %v541 = vunpack.c.h.b16 %v444
    %v542 = vunpack.c.l.b16 %v445
    %v543 = vunpack.c.h.b16 %v445
    %v544 = vunpack.c.l.b16 %v446
    %v545 = vunpack.c.h.b16 %v446
    %v546 = vunpack.c.l.b16 %v447
    %v547 = vunpack.c.h.b16 %v447
    %v548 = vunpack.c.l.b16 %v448
    %v549 = vunpack.c.h.b16 %v448
    %v550 = vunpack.c.l.b16 %v449
    %v551 = vunpack.c.h.b16 %v449
    %v552 = vunpack.c.l.b16 %v450
    %v553 = vunpack.c.h.b16 %v450
    %v554 = vpack.c.b16 %v508, %v506
    %v555 = vpack.c.b16 %v509, %v507
    %v556 = vpack.c.b16 %v512, %v510
    %v557 = vpack.c.b16 %v513, %v511
    %v558 = vpack.c.b16 %v516, %v514
    %v559 = vpack.c.b16 %v517, %v515
    %v560 = vpack.c.b16 %v520, %v518
    %v561 = vpack.c.b16 %v521, %v519
    %v562 = vpack.c.b16 %v524, %v522
    %v563 = vpack.c.b16 %v525, %v523
    %v564 = vpack.c.b16 %v528, %v526
    %v565 = vpack.c.b16 %v529, %v527
    %v566 = vpack.c.b16 %v532, %v530
    %v567 = vpack.c.b16 %v533, %v531
    %v568 = vpack.c.b16 %v536, %v534
    %v569 = vpack.c.b16 %v537, %v535
    %v570 = vpack.c.b16 %v540, %v538
    %v571 = vpack.c.b16 %v541, %v539
    %v572 = vpack.c.b16 %v544, %v542
    %v573 = vpack.c.b16 %v545, %v543
    %v574 = vpack.c.b16 %v548, %v546
    %v575 = vpack.c.b16 %v549, %v547
    %v576 = vpack.c.b16 %v552, %v550
    %v577 = vpack.c.b16 %v553, %v551
    %v603 = vsel %vm366, %v476, 0
    %605 = vmatpush.bf16.msra.mxu0 %v568
    %606 = vmatpush.bf16.msra.mxu0 %v566
    %607 = vmatpush.bf16.msra.mxu0 %v564
    %608 = vmatpush.bf16.msra.mxu0 %v562
    %609 = vmatpush.bf16.msra.mxu0 %v560
    %610 = vmatpush.bf16.msra.mxu0 %v558
    %611 = vmatpush.bf16.msra.mxu0 %v556
    %612 = vmatpush.bf16.msra.mxu0 %v554
    %613 = vmatmul.bf16.gmra.mxu0 %v475
    %v614 = vpop.f32.mrf.mxu0
    %v615 = vadd.f32 %v478, %v614
    %v616 = vpop.f32.mrf.mxu0
    %617 = vdwg.mxu0
    %618 = vmatpush.bf16.msra.mxu0 0
    %619 = vmatpush.bf16.msra.mxu0 0
    %620 = vmatpush.bf16.msra.mxu0 0
    %621 = vmatpush.bf16.msra.mxu0 0
    %622 = vmatpush.bf16.msra.mxu0 %v576
    %623 = vmatpush.bf16.msra.mxu0 %v574
    %624 = vmatpush.bf16.msra.mxu0 %v572
    %625 = vmatpush.bf16.msra.mxu0 %v570
    %626 = vmatmul.bf16.gmra.mxu0 %v603
    %v627 = vpop.f32.mrf.mxu0
    %v628 = vadd.f32 %v615, %v627
    %v629 = vpop.f32.mrf.mxu0
    %630 = vdwg.mxu0
    %631 = vmatpush.bf16.msra.mxu0 %v569
    %632 = vmatpush.bf16.msra.mxu0 %v567
    %633 = vmatpush.bf16.msra.mxu0 %v565
    %634 = vmatpush.bf16.msra.mxu0 %v563
    %635 = vmatpush.bf16.msra.mxu0 %v561
    %636 = vmatpush.bf16.msra.mxu0 %v559
    %637 = vmatpush.bf16.msra.mxu0 %v557
    %638 = vmatpush.bf16.msra.mxu0 %v555
    %639 = vmatmul.bf16.gmra.mxu0 %v475
    %v640 = vpop.f32.mrf.mxu0
    %v641 = vadd.f32 %v479, %v640
    %v642 = vpop.f32.mrf.mxu0
    %643 = vdwg.mxu0
    %644 = vmatpush.bf16.msra.mxu0 0
    %645 = vmatpush.bf16.msra.mxu0 0
    %646 = vmatpush.bf16.msra.mxu0 0
    %647 = vmatpush.bf16.msra.mxu0 0
    %648 = vmatpush.bf16.msra.mxu0 %v577
    %649 = vmatpush.bf16.msra.mxu0 %v575
    %650 = vmatpush.bf16.msra.mxu0 %v573
    %651 = vmatpush.bf16.msra.mxu0 %v571
    %652 = vmatmul.bf16.gmra.mxu0 %v603
    %v653 = vpop.f32.mrf.mxu0
    %v654 = vadd.f32 %v641, %v653
    %v655 = vpop.f32.mrf.mxu0
    %656 = vdwg.mxu0
    %v657 = vadd.f32 %v628, %v171
    %v658 = vadd.f32 %v654, %v184
    %v659 = vmul.f32 %v657, 0.5
    %v660 = vmul.f32 %v658, 0.5
    %s661 = scalar_lea.vmem %s5, 7
    %v662 = vld [vmem:[%s661] ss:$8 sm:$0x3]
    %s663 = scalar_lea.vmem %s5, 16
    %v664 = vld [vmem:[%s663] ss:$8 sm:$0x3]
    %s665 = scalar_lea.vmem [#allocation6], 384
    %v666 = vld [vmem:[%s665] sm:$0xff]
    %v667 = vld [vmem:[%s665 + $0x8] sm:$0xff]
    %v668 = vld [vmem:[%s665 + $0x10] sm:$0xff]
    %v669 = vld [vmem:[%s665 + $0x18] sm:$0xff]
    %v670 = vld [vmem:[%s665 + $0x20] sm:$0xff]
    %v671 = vld [vmem:[%s665 + $0x28] sm:$0xff]
    %v672 = vld [vmem:[%s665 + $0x30] sm:$0xff]
    %v673 = vld [vmem:[%s665 + $0x38] sm:$0xff]
    %v674 = vld [vmem:[%s665 + $0x40] sm:$0xff]
    %v675 = vld [vmem:[%s665 + $0x48] sm:$0xff]
    %v676 = vld [vmem:[%s665 + $0x50] sm:$0xff]
    %v677 = vld [vmem:[%s665 + $0x58] sm:$0xff]
    %v678 = vld [vmem:[%s665 + $0x60] sm:$0xff]
    %v679 = vld [vmem:[%s665 + $0x68] sm:$0xff]
    %v680 = vld [vmem:[%s665 + $0x70] sm:$0xff]
    %v681 = vld [vmem:[%s665 + $0x78] sm:$0xff]
    %v682 = vld [vmem:[%s665 + $0x80] sm:$0xff]
    %v683 = vld [vmem:[%s665 + $0x88] sm:$0xff]
    %v684 = vld [vmem:[%s665 + $0x90] sm:$0xff]
    %v685 = vld [vmem:[%s665 + $0x98] sm:$0xff]
    %v686 = vld [vmem:[%s665 + $0xa0] sm:$0xff]
    %v687 = vld [vmem:[%s665 + $0xa8] sm:$0xff]
    %v688 = vld [vmem:[%s665 + $0xb0] sm:$0xff]
    %v689 = vld [vmem:[%s665 + $0xb8] sm:$0xff]
    %s690 = scalar_lea.vmem %s5, 17
    %v691 = vld [vmem:[%s690] ss:$8 sm:$0x3]
    %s692 = sld [smem:[#allocation2 + $0x2]]
    %v694 = vperm.slane %v662, 0
    %v695 = vperm.slane %v662, 1
    %v698 = vmul.f32 %v659, %v694
    %v699 = vmul.f32 %v660, %v695
    %v701 = vperm.slane %v664, 0
    %v702 = vperm.slane %v664, 1
    %v705 = vadd.f32 %v698, %v701
    %v706 = vadd.f32 %v699, %v702
    %vm707 = vcmp.gt.f32.partialorder %v705, 0.0
    %vm708 = vcmp.gt.f32.partialorder %v706, 0.0
    %v709 = vstv %s692
    %v710 = vmul.f32 %v709, %v705
    %v711 = vmul.f32 %v709, %v706
    %v712 = vsel %vm707, %v705, %v710
    %v713 = vsel %vm708, %v706, %v711
    %v714 = vpack.c.bf16 %v712, %v712
    %v715 = vpack.c.bf16 %v713, %v713
    %v717 = vperm.slane %v691, 0
    %v718 = vperm.slane %v691, 1
    %v745 = vunpack.c.l.b16 %v666
    %v746 = vunpack.c.h.b16 %v666
    %v747 = vunpack.c.l.b16 %v667
    %v748 = vunpack.c.h.b16 %v667
    %v749 = vunpack.c.l.b16 %v668
    %v750 = vunpack.c.h.b16 %v668
    %v751 = vunpack.c.l.b16 %v669
    %v752 = vunpack.c.h.b16 %v669
    %v753 = vunpack.c.l.b16 %v670
    %v754 = vunpack.c.h.b16 %v670
    %v755 = vunpack.c.l.b16 %v671
    %v756 = vunpack.c.h.b16 %v671
    %v757 = vunpack.c.l.b16 %v672
    %v758 = vunpack.c.h.b16 %v672
    %v759 = vunpack.c.l.b16 %v673
    %v760 = vunpack.c.h.b16 %v673
    %v761 = vunpack.c.l.b16 %v674
    %v762 = vunpack.c.h.b16 %v674
    %v763 = vunpack.c.l.b16 %v675
    %v764 = vunpack.c.h.b16 %v675
    %v765 = vunpack.c.l.b16 %v676
    %v766 = vunpack.c.h.b16 %v676
    %v767 = vunpack.c.l.b16 %v677
    %v768 = vunpack.c.h.b16 %v677
    %v769 = vunpack.c.l.b16 %v678
    %v770 = vunpack.c.h.b16 %v678
    %v771 = vunpack.c.l.b16 %v679
    %v772 = vunpack.c.h.b16 %v679
    %v773 = vunpack.c.l.b16 %v680
    %v774 = vunpack.c.h.b16 %v680
    %v775 = vunpack.c.l.b16 %v681
    %v776 = vunpack.c.h.b16 %v681
    %v777 = vunpack.c.l.b16 %v682
    %v778 = vunpack.c.h.b16 %v682
    %v779 = vunpack.c.l.b16 %v683
    %v780 = vunpack.c.h.b16 %v683
    %v781 = vunpack.c.l.b16 %v684
    %v782 = vunpack.c.h.b16 %v684
    %v783 = vunpack.c.l.b16 %v685
    %v784 = vunpack.c.h.b16 %v685
    %v785 = vunpack.c.l.b16 %v686
    %v786 = vunpack.c.h.b16 %v686
    %v787 = vunpack.c.l.b16 %v687
    %v788 = vunpack.c.h.b16 %v687
    %v789 = vunpack.c.l.b16 %v688
    %v790 = vunpack.c.h.b16 %v688
    %v791 = vunpack.c.l.b16 %v689
    %v792 = vunpack.c.h.b16 %v689
    %v793 = vpack.c.b16 %v747, %v745
    %v794 = vpack.c.b16 %v748, %v746
    %v795 = vpack.c.b16 %v751, %v749
    %v796 = vpack.c.b16 %v752, %v750
    %v797 = vpack.c.b16 %v755, %v753
    %v798 = vpack.c.b16 %v756, %v754
    %v799 = vpack.c.b16 %v759, %v757
    %v800 = vpack.c.b16 %v760, %v758
    %v801 = vpack.c.b16 %v763, %v761
    %v802 = vpack.c.b16 %v764, %v762
    %v803 = vpack.c.b16 %v767, %v765
    %v804 = vpack.c.b16 %v768, %v766
    %v805 = vpack.c.b16 %v771, %v769
    %v806 = vpack.c.b16 %v772, %v770
    %v807 = vpack.c.b16 %v775, %v773
    %v808 = vpack.c.b16 %v776, %v774
    %v809 = vpack.c.b16 %v779, %v777
    %v810 = vpack.c.b16 %v780, %v778
    %v811 = vpack.c.b16 %v783, %v781
    %v812 = vpack.c.b16 %v784, %v782
    %v813 = vpack.c.b16 %v787, %v785
    %v814 = vpack.c.b16 %v788, %v786
    %v815 = vpack.c.b16 %v791, %v789
    %v816 = vpack.c.b16 %v792, %v790
    %v842 = vsel %vm366, %v715, 0
    %844 = vmatpush.bf16.msra.mxu0 %v807
    %845 = vmatpush.bf16.msra.mxu0 %v805
    %846 = vmatpush.bf16.msra.mxu0 %v803
    %847 = vmatpush.bf16.msra.mxu0 %v801
    %848 = vmatpush.bf16.msra.mxu0 %v799
    %849 = vmatpush.bf16.msra.mxu0 %v797
    %850 = vmatpush.bf16.msra.mxu0 %v795
    %851 = vmatpush.bf16.msra.mxu0 %v793
    %852 = vmatmul.bf16.gmra.mxu0 %v714
    %v853 = vpop.f32.mrf.mxu0
    %v854 = vadd.f32 %v717, %v853
    %v855 = vpop.f32.mrf.mxu0
    %856 = vdwg.mxu0
    %857 = vmatpush.bf16.msra.mxu0 0
    %858 = vmatpush.bf16.msra.mxu0 0
    %859 = vmatpush.bf16.msra.mxu0 0
    %860 = vmatpush.bf16.msra.mxu0 0
    %861 = vmatpush.bf16.msra.mxu0 %v815
    %862 = vmatpush.bf16.msra.mxu0 %v813
    %863 = vmatpush.bf16.msra.mxu0 %v811
    %864 = vmatpush.bf16.msra.mxu0 %v809
    %865 = vmatmul.bf16.gmra.mxu0 %v842
    %v866 = vpop.f32.mrf.mxu0
    %v867 = vadd.f32 %v854, %v866
    %v868 = vpop.f32.mrf.mxu0
    %869 = vdwg.mxu0
    %870 = vmatpush.bf16.msra.mxu0 %v808
    %871 = vmatpush.bf16.msra.mxu0 %v806
    %872 = vmatpush.bf16.msra.mxu0 %v804
    %873 = vmatpush.bf16.msra.mxu0 %v802
    %874 = vmatpush.bf16.msra.mxu0 %v800
    %875 = vmatpush.bf16.msra.mxu0 %v798
    %876 = vmatpush.bf16.msra.mxu0 %v796
    %877 = vmatpush.bf16.msra.mxu0 %v794
    %878 = vmatmul.bf16.gmra.mxu0 %v714
    %v879 = vpop.f32.mrf.mxu0
    %v880 = vadd.f32 %v718, %v879
    %v881 = vpop.f32.mrf.mxu0
    %882 = vdwg.mxu0
    %883 = vmatpush.bf16.msra.mxu0 0
    %884 = vmatpush.bf16.msra.mxu0 0
    %885 = vmatpush.bf16.msra.mxu0 0
    %886 = vmatpush.bf16.msra.mxu0 0
    %887 = vmatpush.bf16.msra.mxu0 %v816
    %888 = vmatpush.bf16.msra.mxu0 %v814
    %889 = vmatpush.bf16.msra.mxu0 %v812
    %890 = vmatpush.bf16.msra.mxu0 %v810
    %891 = vmatmul.bf16.gmra.mxu0 %v842
    %v892 = vpop.f32.mrf.mxu0
    %v893 = vadd.f32 %v880, %v892
    %v894 = vpop.f32.mrf.mxu0
    %895 = vdwg.mxu0
    %v896 = vadd.f32 %v867, %v659
    %v897 = vadd.f32 %v893, %v660
    %v898 = vmul.f32 %v896, 0.5
    %v899 = vmul.f32 %v897, 0.5
    %s900 = scalar_lea.vmem %s5, 18
    %v901 = vld [vmem:[%s900] ss:$8 sm:$0x3]
    %s902 = scalar_lea.vmem %s5, 19
    %v903 = vld [vmem:[%s902] ss:$8 sm:$0x3]
    %v904 = vld [vmem:[%s4] sm:$0xf]
    %v905 = vld [vmem:[%s4 + $0x4] sm:$0xf]
    %v906 = vld [vmem:[%s4 + $0x8] sm:$0xf]
    %v907 = vld [vmem:[%s4 + $0xc] sm:$0xf]
    %v908 = vld [vmem:[%s4 + $0x10] sm:$0xf]
    %v909 = vld [vmem:[%s4 + $0x14] sm:$0xf]
    %v910 = vld [vmem:[%s4 + $0x18] sm:$0xf]
    %v911 = vld [vmem:[%s4 + $0x1c] sm:$0xf]
    %v912 = vld [vmem:[%s4 + $0x20] sm:$0xf]
    %v913 = vld [vmem:[%s4 + $0x24] sm:$0xf]
    %v914 = vld [vmem:[%s4 + $0x28] sm:$0xf]
    %v915 = vld [vmem:[%s4 + $0x2c] sm:$0xf]
    %v916 = vld [vmem:[%s4 + $0x30] sm:$0xf]
    %v917 = vld [vmem:[%s4 + $0x34] sm:$0xf]
    %v918 = vld [vmem:[%s4 + $0x38] sm:$0xf]
    %v919 = vld [vmem:[%s4 + $0x3c] sm:$0xf]
    %v920 = vld [vmem:[%s4 + $0x40] sm:$0xf]
    %v921 = vld [vmem:[%s4 + $0x44] sm:$0xf]
    %v922 = vld [vmem:[%s4 + $0x48] sm:$0xf]
    %v923 = vld [vmem:[%s4 + $0x4c] sm:$0xf]
    %v924 = vld [vmem:[%s4 + $0x50] sm:$0xf]
    %v925 = vld [vmem:[%s4 + $0x54] sm:$0xf]
    %v926 = vld [vmem:[%s4 + $0x58] sm:$0xf]
    %v927 = vld [vmem:[%s4 + $0x5c] sm:$0xf]
    %v928 = vld [vmem:[%s6] sm:$0x1]
    %s929 = sld [smem:[#allocation2 + $0x3]]
    %v931 = vperm.slane %v901, 0
    %v932 = vperm.slane %v901, 1
    %v935 = vmul.f32 %v898, %v931
    %v936 = vmul.f32 %v899, %v932
    %v938 = vperm.slane %v903, 0
    %v939 = vperm.slane %v903, 1
    %v942 = vadd.f32 %v935, %v938
    %v943 = vadd.f32 %v936, %v939
    %vm944 = vcmp.gt.f32.partialorder %v942, 0.0
    %vm945 = vcmp.gt.f32.partialorder %v943, 0.0
    %v946 = vstv %s929
    %v947 = vmul.f32 %v946, %v942
    %v948 = vmul.f32 %v946, %v943
    %v949 = vsel %vm944, %v942, %v947
    %v950 = vsel %vm945, %v943, %v948
    %v951 = vpack.c.bf16 %v949, %v949
    %v952 = vpack.c.bf16 %v950, %v950
    %v954 = vperm.slane %v928, 0
    %v980 = vunpack.c.l.b16 %v904
    %v981 = vunpack.c.l.b16 %v905
    %v982 = vunpack.c.l.b16 %v906
    %v983 = vunpack.c.l.b16 %v907
    %v984 = vunpack.c.l.b16 %v908
    %v985 = vunpack.c.l.b16 %v909
    %v986 = vunpack.c.l.b16 %v910
    %v987 = vunpack.c.l.b16 %v911
    %v988 = vunpack.c.l.b16 %v912
    %v989 = vunpack.c.l.b16 %v913
    %v990 = vunpack.c.l.b16 %v914
    %v991 = vunpack.c.l.b16 %v915
    %v992 = vunpack.c.l.b16 %v916
    %v993 = vunpack.c.l.b16 %v917
    %v994 = vunpack.c.l.b16 %v918
    %v995 = vunpack.c.l.b16 %v919
    %v996 = vunpack.c.l.b16 %v920
    %v997 = vunpack.c.l.b16 %v921
    %v998 = vunpack.c.l.b16 %v922
    %v999 = vunpack.c.l.b16 %v923
    %v1000 = vunpack.c.l.b16 %v924
    %v1001 = vunpack.c.l.b16 %v925
    %v1002 = vunpack.c.l.b16 %v926
    %v1003 = vunpack.c.l.b16 %v927
    %v1004 = vpack.c.b16 %v981, %v980
    %v1005 = vpack.c.b16 %v983, %v982
    %v1006 = vpack.c.b16 %v985, %v984
    %v1007 = vpack.c.b16 %v987, %v986
    %v1008 = vpack.c.b16 %v989, %v988
    %v1009 = vpack.c.b16 %v991, %v990
    %v1010 = vpack.c.b16 %v993, %v992
    %v1011 = vpack.c.b16 %v995, %v994
    %v1012 = vpack.c.b16 %v997, %v996
    %v1013 = vpack.c.b16 %v999, %v998
    %v1014 = vpack.c.b16 %v1001, %v1000
    %v1015 = vpack.c.b16 %v1003, %v1002
    %v1029 = vsel %vm366, %v952, 0
    %1031 = vmatpush.bf16.msra.mxu0 %v1011
    %1032 = vmatpush.bf16.msra.mxu0 %v1010
    %1033 = vmatpush.bf16.msra.mxu0 %v1009
    %1034 = vmatpush.bf16.msra.mxu0 %v1008
    %1035 = vmatpush.bf16.msra.mxu0 %v1007
    %1036 = vmatpush.bf16.msra.mxu0 %v1006
    %1037 = vmatpush.bf16.msra.mxu0 %v1005
    %1038 = vmatpush.bf16.msra.mxu0 %v1004
    %1039 = vmatmul.bf16.gmra.mxu0 %v951
    %v1040 = vpop.f32.mrf.mxu0
    %v1041 = vadd.f32 %v954, %v1040
    %v1042 = vpop.f32.mrf.mxu0
    %1043 = vdwg.mxu0
    %1044 = vmatpush.bf16.msra.mxu0 0
    %1045 = vmatpush.bf16.msra.mxu0 0
    %1046 = vmatpush.bf16.msra.mxu0 0
    %1047 = vmatpush.bf16.msra.mxu0 0
    %1048 = vmatpush.bf16.msra.mxu0 %v1015
    %1049 = vmatpush.bf16.msra.mxu0 %v1014
    %1050 = vmatpush.bf16.msra.mxu0 %v1013
    %1051 = vmatpush.bf16.msra.mxu0 %v1012
    %1052 = vmatmul.bf16.gmra.mxu0 %v1029
    %v1053 = vpop.f32.mrf.mxu0
    %v1054 = vadd.f32 %v1041, %v1053
    %v1055 = vpop.f32.mrf.mxu0
    %1056 = vdwg.mxu0
    %vm1057 = vcmask 261120
    %1058 = vst.msk [vmem:[#allocation7] sm:$0xff] %vm1057, %v1054
    // Predicated region
    $region38: #{linear_block_forward.1} parent=1 // pred_check
      _
    $region39: #{linear_block_forward.1} parent=1 // pred_check_branch
      %1060 = sbr.rel (0) target = $region41
    $region40: #{linear_block_forward.1} parent=1 // pred_region
      %1062 = vsyncadd [#allocation4], 0
      %s1064 = sshll.u32 [#allocation7], 4
      %s1065 = int_to_ptr.vmem [resolvable:$true] %s1064
      %s1066 = sshll.u32 %s7, 4
      %s1067 = int_to_ptr.hbm [resolvable:$true] %s1066
      %1069 = dma.vmem_to_hbm [thread:$0]  %s1065, 128, %s1067, [#allocation4]
    $region41: #{linear_block_forward.1} parent=1 // pred_fallthru
      _
    // Predicated region
    $region42: #{linear_block_forward.1} parent=1 // pred_check
      _
    $region43: #{linear_block_forward.1} parent=1 // pred_check_branch
      %1071 = sbr.rel (0) target = $region45
    $region44: #{linear_block_forward.1} parent=1 // pred_region
      %1073 = dma.done [#allocation4], 128
    $region45: #{linear_block_forward.1} parent=1 // pred_fallthru
      _
    %1074 = vsyncpa [#allocation3], 1
    %1075 = vsyncpa [#allocation4], 1
    %1076 = vsyncpa [#allocation5], 1

</llo_original>
